<compile_context>
chip_gen: v7x
topology: tpu7x:2x2x1
jax: 0.10.0
libtpu: 0.0.40
codegen_flags: <defaults>
</compile_context>

<pallas_src>
import jax
import jax.numpy as jnp
from jax.experimental import pallas as pl
from jax.experimental.pallas import tpu as pltpu


def _round_up(v, m):
    return (v + m - 1) // m * m


def shapeconv_forward(x, weight):
    """x: (B, C_in, L) float32; weight: (C_out, C_in, K) float32 -> (B, C_out)."""
    x = x.astype(jnp.float32)
    weight = weight.astype(jnp.float32)
    B, C_in, L = x.shape
    C_out, _, K = weight.shape
    T = L - K + 1
    assert T >= 1, "sequence shorter than shapelet"

    # ---- tiling ------------------------------------------------------------
    H = max(128, _round_up(K - 1, 128))      # lane-aligned halo width (>= K-1)
    tT = min(512, _round_up(T, 128))         # time chunk (lane aligned, v5e-friendly)
    tT = _round_up(tT, H)                    # halo blocked-index trick needs tT % H == 0
    n_chunks = pl.cdiv(T, tT)
    T_comp = n_chunks * tT
    L_pad = T_comp + H

    Bt = min(8, max(1, B // 2))              # >=2 batch-parallel steps whenever B >= 2
    B_pad = _round_up(B, Bt)

    Co_t = min(128, _round_up(C_out, 8))     # C_out tile (<=128 per step)
    C_out_pad = _round_up(C_out, Co_t)

    D = C_in * K                             # folded contraction depth
    D_aug = D + 1                            # + ones row carrying ||W_o||^2
    n_strips = tT // 128

    # ---- wrapper-side packing (tiny, done once) -----------------------------
    x_p = jnp.pad(x, ((0, B_pad - B), (0, 0), (0, L_pad - L)))
    w_flat = jnp.transpose(weight, (0, 2, 1)).reshape(C_out, D)       # [o, k*C_in + c]
    wn = jnp.sum(weight * weight, axis=(1, 2)).reshape(C_out, 1)      # ||W_o||^2
    w_aug = jnp.concatenate([-2.0 * w_flat, wn], axis=1)              # (C_out, D+1)
    w_aug = jnp.pad(w_aug, ((0, C_out_pad - C_out), (0, 0)))
    pen = jnp.where(jnp.arange(T_comp) < T, 0.0, jnp.inf)             # +inf past last window
    pen = pen.astype(jnp.float32).reshape(1, T_comp)

    def kernel(cur_ref, halo_ref, w_ref, pen_ref, o_ref, xcat_ref, slab_ref, min_ref):
        # cur_ref : (Bt, C_in, tT)     current time chunk
        # halo_ref: (Bt, C_in, H)      first H columns of the next chunk
        # w_ref   : (Co_t, D+1)        packed (-2*W | ||W||^2)
        # pen_ref : (1, tT)            +inf penalty for window starts >= T
        # o_ref   : (Bt, Co_t, 1)      min squared distances
        # xcat_ref: (C_in+1, tT+H)     stitched chunk+halo, last row = energy e[t]
        # slab_ref: (D+1, tT)          unfolded window slab (+ ones row)
        # min_ref : (Bt, Co_t, 128)    running 128-lane strip minima across chunks
        ci = pl.program_id(2)

        @pl.when(ci == 0)
        def _init():
            min_ref[...] = jnp.full((Bt, Co_t, 128), jnp.inf, jnp.float32)

        # ones row so the MXU contraction adds ||W_o||^2 for free.
        slab_ref[pl.ds(D, 1), :] = jnp.ones((1, tT), jnp.float32)

        w = w_ref[...]                                        # (Co_t, D+1)
        pen_row = pen_ref[...]                                # (1, tT)

        for b in range(Bt):                                   # small static unroll
            cur = cur_ref[b]                                  # (C_in, tT)
            hv = halo_ref[b]                                  # (C_in, H)

            # Stitch chunk + halo; compute per-position energy into the spare row.
            xcat_ref[pl.ds(0, C_in), pl.ds(0, tT)] = cur
            xcat_ref[pl.ds(0, C_in), pl.ds(tT, H)] = hv
            xcat_ref[pl.ds(C_in, 1), pl.ds(0, tT)] = jnp.sum(cur * cur, axis=0, keepdims=True)
            xcat_ref[pl.ds(C_in, 1), pl.ds(tT, H)] = jnp.sum(hv * hv, axis=0, keepdims=True)

            # Unfold: slab rows [k*C_in, (k+1)*C_in) = x[:, t0+k : t0+k+tT].
            slab_ref[pl.ds(0, C_in), :] = cur
            for k in range(1, K):
                slab_ref[pl.ds(k * C_in, C_in), :] = xcat_ref[pl.ds(0, C_in), pl.ds(k, tT)]

            # One full-depth MXU matmul: s = ||W||^2 - 2*conv.
            s = jax.lax.dot_general(
                w, slab_ref[...], (((1,), (0,)), ((), ())),
                preferred_element_type=jnp.float32)           # (Co_t, tT)

            # Window norm = sliding sum of K shifted energy values (+ penalty).
            xn = xcat_ref[pl.ds(C_in, 1), pl.ds(0, tT)] + pen_row
            for k in range(1, K):
                xn = xn + xcat_ref[pl.ds(C_in, 1), pl.ds(k, tT)]

            dist = s + xn                                     # (Co_t, tT)

            # Defer the cross-lane reduce: fold 128-lane strips on the VPU.
            strip = dist[:, 0:128]
            for j in range(1, n_strips):
                strip = jnp.minimum(strip, dist[:, j * 128:(j + 1) * 128])
            min_ref[b] = jnp.minimum(min_ref[b], strip)

        @pl.when(ci == pl.num_programs(2) - 1)
        def _finalize():
            for b in range(Bt):
                o_ref[b, :, :] = jnp.min(min_ref[b], axis=-1, keepdims=True)

    out = pl.pallas_call(
        kernel,
        out_shape=jax.ShapeDtypeStruct((B_pad, C_out_pad, 1), jnp.float32),
        grid_spec=pltpu.PrefetchScalarGridSpec(
            num_scalar_prefetch=0,
            grid=(B_pad // Bt, C_out_pad // Co_t, n_chunks),
            in_specs=[
                # current chunk of x
                pl.BlockSpec((Bt, C_in, tT), lambda bi, oi, ci: (bi, 0, ci)),
                # halo: first H columns of the next chunk (same array, 2nd view)
                pl.BlockSpec((Bt, C_in, H),
                             lambda bi, oi, ci: (bi, 0, (ci + 1) * (tT // H))),
                # packed weights (-2*W | ||W||^2)
                pl.BlockSpec((Co_t, D_aug), lambda bi, oi, ci: (oi, 0)),
                # +inf penalty row for invalid window starts
                pl.BlockSpec((1, tT), lambda bi, oi, ci: (0, ci)),
            ],
            out_specs=pl.BlockSpec((Bt, Co_t, 1), lambda bi, oi, ci: (bi, oi, 0)),
            scratch_shapes=[
                pltpu.VMEM((C_in + 1, tT + H), jnp.float32),   # stitched x + energy row
                pltpu.VMEM((D_aug, tT), jnp.float32),          # unfolded slab (+ ones row)
                pltpu.VMEM((Bt, Co_t, 128), jnp.float32),      # running strip minima
            ],
        ),
        compiler_params=pltpu.CompilerParams(
            dimension_semantics=("parallel", "parallel", "arbitrary")),
    )(x_p, x_p, w_aug, pen)

    return out[:B, :C_out, 0]


def shapeconv_reference(x, weight):
    """Plain-JAX reference mirroring the PyTorch forward exactly."""
    B, C_in, L = x.shape
    C_out, _, K = weight.shape
    T = L - K + 1
    conv_out = jax.lax.conv_general_dilated(
        x, weight, window_strides=(1,), padding="VALID",
        dimension_numbers=("NCH", "OIH", "NCH"))                 # (B, C_out, T)
    shapelet_norm = jnp.sum(weight ** 2, axis=(1, 2)) / 2        # (C_out,)
    idx = jnp.arange(T)[:, None] + jnp.arange(K)[None, :]
    sub = x[:, :, idx]                                           # (B, C_in, T, K)
    input_norm = jnp.sum(sub ** 2, axis=(1, 3)) / 2              # (B, T)
    norm_term = shapelet_norm[None, :, None] + input_norm[:, None, :]
    features = conv_out - norm_term                              # (B, C_out, T)
    features = jnp.max(features, axis=-1)                        # max_pool1d over T
    return -2.0 * features                                       # (B, C_out)


if __name__ == "__main__":
    # Small shapes consistent with the module's forward.
    B, C_in, L = 2, 4, 16
    C_out, K = 8, 5          # out_channels (num shapelets), shapelet_length

    key = jax.random.PRNGKey(0)
    kx, kw = jax.random.split(key)
    x = jax.random.normal(kx, (B, C_in, L), dtype=jnp.float32)
    weight = jax.random.normal(kw, (C_out, C_in, K), dtype=jnp.float32)

    out = jax.block_until_ready(shapeconv_forward(x, weight))
    ref = shapeconv_reference(x, weight)

    assert out.shape == (B, C_out)
    assert jnp.allclose(out, ref, atol=1e-3, rtol=1e-3), (out, ref)

    print("KERNEL_OK")
</pallas_src>

<mosaic_0001>
module attributes {stable_mosaic.version = 11 : i64} {
  func.func @kernel(%arg0: i32, %arg1: i32, %arg2: i32, %arg3: memref<1x4x128xf32, #tpu.memory_space<vmem>>, %arg4: memref<1x4x128xf32, #tpu.memory_space<vmem>>, %arg5: memref<8x21xf32, #tpu.memory_space<vmem>>, %arg6: memref<1x128xf32, #tpu.memory_space<vmem>>, %arg7: memref<1x8x1xf32, #tpu.memory_space<vmem>>, %arg8: memref<5x256xf32, #tpu.memory_space<vmem>>, %arg9: memref<21x128xf32, #tpu.memory_space<vmem>>, %arg10: memref<1x8x128xf32, #tpu.memory_space<vmem>>) attributes {dimension_semantics = [#tpu.dimension_semantics<parallel>, #tpu.dimension_semantics<parallel>, #tpu.dimension_semantics<arbitrary>], iteration_bounds = array<i64: 2, 1, 1>, scalar_prefetch = 0 : i64, scratch_operands = 3 : i64, tpu.core_type = #tpu.core_type<tc>, window_params = [{transform_indices = @transform_0, window_bounds = array<i64: 1, 4, 128>}, {transform_indices = @transform_1, window_bounds = array<i64: 1, 4, 128>}, {transform_indices = @transform_2, window_bounds = array<i64: 8, 21>}, {transform_indices = @transform_3, window_bounds = array<i64: 1, 128>}, {transform_indices = @transform_4, window_bounds = array<i64: 1, 8, 1>}]} {
    %c0_i32 = arith.constant 0 : i32
    %0 = arith.cmpi eq, %arg2, %c0_i32 : i32
    %1 = arith.extui %0 : i1 to i32
    %c0_i32_0 = arith.constant 0 : i32
    %2 = arith.cmpi ne, %1, %c0_i32_0 : i32
    scf.if %2 {
      %cst_52 = arith.constant 0x7F800000 : f32
      %53 = vector.broadcast %cst_52 : f32 to vector<1x8x128xf32>
      %c0_53 = arith.constant 0 : index
      %c0_54 = arith.constant 0 : index
      %c0_55 = arith.constant 0 : index
      %54 = vector.load %arg10[%c0_53, %c0_54, %c0_55] : memref<1x8x128xf32, #tpu.memory_space<vmem>>, vector<1x8x128xf32>
      tpu.vector_store %arg10[%c0_53, %c0_54, %c0_55], %53 {strides = array<i32>} : memref<1x8x128xf32, #tpu.memory_space<vmem>>, vector<1x8x128xf32>,
    } else {
    }
    %cst = arith.constant 1.000000e+00 : f32
    %3 = vector.broadcast %cst : f32 to vector<1x128xf32>
    %c20 = arith.constant 20 : index
    %c0 = arith.constant 0 : index
    %4 = vector.load %arg9[%c20, %c0] : memref<21x128xf32, #tpu.memory_space<vmem>>, vector<1x128xf32>
    tpu.vector_store %arg9[%c20, %c0], %3 {strides = array<i32>} : memref<21x128xf32, #tpu.memory_space<vmem>>, vector<1x128xf32>,
    %c0_1 = arith.constant 0 : index
    %c0_2 = arith.constant 0 : index
    %5 = vector.load %arg5[%c0_1, %c0_2] : memref<8x21xf32, #tpu.memory_space<vmem>>, vector<8x21xf32>
    %c0_3 = arith.constant 0 : index
    %c0_4 = arith.constant 0 : index
    %6 = vector.load %arg6[%c0_3, %c0_4] : memref<1x128xf32, #tpu.memory_space<vmem>>, vector<1x128xf32>
    %c0_5 = arith.constant 0 : index
    %c0_6 = arith.constant 0 : index
    %c0_7 = arith.constant 0 : index
    %7 = vector.load %arg3[%c0_5, %c0_6, %c0_7] : memref<1x4x128xf32, #tpu.memory_space<vmem>>, vector<1x4x128xf32>
    %8 = vector.shape_cast %7 : vector<1x4x128xf32> to vector<4x128xf32>
    %c0_8 = arith.constant 0 : index
    %c0_9 = arith.constant 0 : index
    %c0_10 = arith.constant 0 : index
    %9 = vector.load %arg4[%c0_8, %c0_9, %c0_10] : memref<1x4x128xf32, #tpu.memory_space<vmem>>, vector<1x4x128xf32>
    %10 = vector.shape_cast %9 : vector<1x4x128xf32> to vector<4x128xf32>
    %c0_11 = arith.constant 0 : index
    %c0_12 = arith.constant 0 : index
    %11 = vector.load %arg8[%c0_11, %c0_12] : memref<5x256xf32, #tpu.memory_space<vmem>>, vector<4x128xf32>
    tpu.vector_store %arg8[%c0_11, %c0_12], %8 {strides = array<i32>} : memref<5x256xf32, #tpu.memory_space<vmem>>, vector<4x128xf32>,
    %c0_13 = arith.constant 0 : index
    %c128 = arith.constant 128 : index
    %12 = vector.load %arg8[%c0_13, %c128] : memref<5x256xf32, #tpu.memory_space<vmem>>, vector<4x128xf32>
    tpu.vector_store %arg8[%c0_13, %c128], %10 {strides = array<i32>} : memref<5x256xf32, #tpu.memory_space<vmem>>, vector<4x128xf32>,
    %13 = arith.mulf %8, %8 : vector<4x128xf32>
    %cst_14 = arith.constant dense<0.000000e+00> : vector<128xf32>
    %14 = vector.multi_reduction <add>, %13, %cst_14 [0] : vector<4x128xf32> to vector<128xf32>
    %15 = vector.shape_cast %14 : vector<128xf32> to vector<1x128xf32>
    %c4 = arith.constant 4 : index
    %c0_15 = arith.constant 0 : index
    %16 = vector.load %arg8[%c4, %c0_15] : memref<5x256xf32, #tpu.memory_space<vmem>>, vector<1x128xf32>
    tpu.vector_store %arg8[%c4, %c0_15], %15 {strides = array<i32>} : memref<5x256xf32, #tpu.memory_space<vmem>>, vector<1x128xf32>,
    %17 = arith.mulf %10, %10 : vector<4x128xf32>
    %cst_16 = arith.constant dense<0.000000e+00> : vector<128xf32>
    %18 = vector.multi_reduction <add>, %17, %cst_16 [0] : vector<4x128xf32> to vector<128xf32>
    %19 = vector.shape_cast %18 : vector<128xf32> to vector<1x128xf32>
    %c4_17 = arith.constant 4 : index
    %c128_18 = arith.constant 128 : index
    %20 = vector.load %arg8[%c4_17, %c128_18] : memref<5x256xf32, #tpu.memory_space<vmem>>, vector<1x128xf32>
    tpu.vector_store %arg8[%c4_17, %c128_18], %19 {strides = array<i32>} : memref<5x256xf32, #tpu.memory_space<vmem>>, vector<1x128xf32>,
    %c0_19 = arith.constant 0 : index
    %c0_20 = arith.constant 0 : index
    %21 = vector.load %arg9[%c0_19, %c0_20] : memref<21x128xf32, #tpu.memory_space<vmem>>, vector<4x128xf32>
    tpu.vector_store %arg9[%c0_19, %c0_20], %8 {strides = array<i32>} : memref<21x128xf32, #tpu.memory_space<vmem>>, vector<4x128xf32>,
    %c0_21 = arith.constant 0 : index
    %c1 = arith.constant 1 : index
    %22 = vector.load %arg8[%c0_21, %c1] : memref<5x256xf32, #tpu.memory_space<vmem>>, vector<4x128xf32>
    %c4_22 = arith.constant 4 : index
    %c0_23 = arith.constant 0 : index
    %23 = vector.load %arg9[%c4_22, %c0_23] : memref<21x128xf32, #tpu.memory_space<vmem>>, vector<4x128xf32>
    tpu.vector_store %arg9[%c4_22, %c0_23], %22 {strides = array<i32>} : memref<21x128xf32, #tpu.memory_space<vmem>>, vector<4x128xf32>,
    %c0_24 = arith.constant 0 : index
    %c2 = arith.constant 2 : index
    %24 = vector.load %arg8[%c0_24, %c2] : memref<5x256xf32, #tpu.memory_space<vmem>>, vector<4x128xf32>
    %c8 = arith.constant 8 : index
    %c0_25 = arith.constant 0 : index
    %25 = vector.load %arg9[%c8, %c0_25] : memref<21x128xf32, #tpu.memory_space<vmem>>, vector<4x128xf32>
    tpu.vector_store %arg9[%c8, %c0_25], %24 {strides = array<i32>} : memref<21x128xf32, #tpu.memory_space<vmem>>, vector<4x128xf32>,
    %c0_26 = arith.constant 0 : index
    %c3 = arith.constant 3 : index
    %26 = vector.load %arg8[%c0_26, %c3] : memref<5x256xf32, #tpu.memory_space<vmem>>, vector<4x128xf32>
    %c12 = arith.constant 12 : index
    %c0_27 = arith.constant 0 : index
    %27 = vector.load %arg9[%c12, %c0_27] : memref<21x128xf32, #tpu.memory_space<vmem>>, vector<4x128xf32>
    tpu.vector_store %arg9[%c12, %c0_27], %26 {strides = array<i32>} : memref<21x128xf32, #tpu.memory_space<vmem>>, vector<4x128xf32>,
    %c0_28 = arith.constant 0 : index
    %c4_29 = arith.constant 4 : index
    %28 = vector.load %arg8[%c0_28, %c4_29] : memref<5x256xf32, #tpu.memory_space<vmem>>, vector<4x128xf32>
    %c16 = arith.constant 16 : index
    %c0_30 = arith.constant 0 : index
    %29 = vector.load %arg9[%c16, %c0_30] : memref<21x128xf32, #tpu.memory_space<vmem>>, vector<4x128xf32>
    tpu.vector_store %arg9[%c16, %c0_30], %28 {strides = array<i32>} : memref<21x128xf32, #tpu.memory_space<vmem>>, vector<4x128xf32>,
    %c0_31 = arith.constant 0 : index
    %c0_32 = arith.constant 0 : index
    %30 = vector.load %arg9[%c0_31, %c0_32] : memref<21x128xf32, #tpu.memory_space<vmem>>, vector<21x128xf32>
    %cst_33 = arith.constant dense<0.000000e+00> : vector<8x128xf32>
    %31 = tpu.matmul %5, %30, %cst_33 {dimension_numbers = #tpu.dot_dimension_numbers<[1], [0], [0], [1], [0, 0, 1, 1], [], []>} : vector<8x21xf32>, vector<21x128xf32>, vector<8x128xf32> -> vector<8x128xf32>
    %c4_34 = arith.constant 4 : index
    %c0_35 = arith.constant 0 : index
    %32 = vector.load %arg8[%c4_34, %c0_35] : memref<5x256xf32, #tpu.memory_space<vmem>>, vector<1x128xf32>
    %33 = arith.addf %32, %6 : vector<1x128xf32>
    %c4_36 = arith.constant 4 : index
    %c1_37 = arith.constant 1 : index
    %34 = vector.load %arg8[%c4_36, %c1_37] : memref<5x256xf32, #tpu.memory_space<vmem>>, vector<1x128xf32>
    %35 = arith.addf %33, %34 : vector<1x128xf32>
    %c4_38 = arith.constant 4 : index
    %c2_39 = arith.constant 2 : index
    %36 = vector.load %arg8[%c4_38, %c2_39] : memref<5x256xf32, #tpu.memory_space<vmem>>, vector<1x128xf32>
    %37 = arith.addf %35, %36 : vector<1x128xf32>
    %c4_40 = arith.constant 4 : index
    %c3_41 = arith.constant 3 : index
    %38 = vector.load %arg8[%c4_40, %c3_41] : memref<5x256xf32, #tpu.memory_space<vmem>>, vector<1x128xf32>
    %39 = arith.addf %37, %38 : vector<1x128xf32>
    %c4_42 = arith.constant 4 : index
    %c4_43 = arith.constant 4 : index
    %40 = vector.load %arg8[%c4_42, %c4_43] : memref<5x256xf32, #tpu.memory_space<vmem>>, vector<1x128xf32>
    %41 = arith.addf %39, %40 : vector<1x128xf32>
    %42 = vector.broadcast %41 : vector<1x128xf32> to vector<8x128xf32>
    %43 = arith.addf %31, %42 : vector<8x128xf32>
    %c0_44 = arith.constant 0 : index
    %c0_45 = arith.constant 0 : index
    %c0_46 = arith.constant 0 : index
    %44 = vector.load %arg10[%c0_44, %c0_45, %c0_46] : memref<1x8x128xf32, #tpu.memory_space<vmem>>, vector<1x8x128xf32>
    %45 = vector.shape_cast %44 : vector<1x8x128xf32> to vector<8x128xf32>
    %46 = arith.minimumf %45, %43 : vector<8x128xf32>
    %c0_47 = arith.constant 0 : index
    %c0_48 = arith.constant 0 : index
    %c0_49 = arith.constant 0 : index
    %47 = vector.load %arg10[%c0_47, %c0_48, %c0_49] : memref<1x8x128xf32, #tpu.memory_space<vmem>>, vector<1x8x128xf32>
    %48 = vector.shape_cast %47 : vector<1x8x128xf32> to vector<8x128xf32>
    %49 = vector.shape_cast %46 : vector<8x128xf32> to vector<1x8x128xf32>
    tpu.vector_store %arg10[%c0_47, %c0_48, %c0_49], %49 {strides = array<i32>} : memref<1x8x128xf32, #tpu.memory_space<vmem>>, vector<1x8x128xf32>,
    %c0_i32_50 = arith.constant 0 : i32
    %50 = arith.cmpi eq, %arg2, %c0_i32_50 : i32
    %51 = arith.extui %50 : i1 to i32
    %c0_i32_51 = arith.constant 0 : i32
    %52 = arith.cmpi ne, %51, %c0_i32_51 : i32
    scf.if %52 {
      %c0_52 = arith.constant 0 : index
      %c0_53 = arith.constant 0 : index
      %c0_54 = arith.constant 0 : index
      %53 = vector.load %arg10[%c0_52, %c0_53, %c0_54] : memref<1x8x128xf32, #tpu.memory_space<vmem>>, vector<1x8x128xf32>
      %54 = vector.shape_cast %53 : vector<1x8x128xf32> to vector<8x128xf32>
      %cst_55 = arith.constant dense<0x7F800000> : vector<8xf32>
      %55 = vector.multi_reduction <minimumf>, %54, %cst_55 [1] : vector<8x128xf32> to vector<8xf32>
      %56 = vector.shape_cast %55 : vector<8xf32> to vector<8x1xf32>
      %c0_56 = arith.constant 0 : index
      %c0_57 = arith.constant 0 : index
      %c0_58 = arith.constant 0 : index
      %57 = vector.load %arg7[%c0_56, %c0_57, %c0_58] : memref<1x8x1xf32, #tpu.memory_space<vmem>>, vector<1x8x1xf32>
      %58 = vector.shape_cast %57 : vector<1x8x1xf32> to vector<8x1xf32>
      %59 = vector.shape_cast %56 : vector<8x1xf32> to vector<1x8x1xf32>
      tpu.vector_store %arg7[%c0_56, %c0_57, %c0_58], %59 {strides = array<i32>} : memref<1x8x1xf32, #tpu.memory_space<vmem>>, vector<1x8x1xf32>,
    } else {
    }
    return
  }
  func.func @transform_0(%arg0: i32, %arg1: i32, %arg2: i32) -> (i32, i32, i32) {
    %c0_i32 = arith.constant 0 : i32
    %c0_i32_0 = arith.constant 0 : i32
    return %arg0, %c0_i32, %arg2 : i32, i32, i32
  }
  func.func @transform_1(%arg0: i32, %arg1: i32, %arg2: i32) -> (i32, i32, i32) {
    %c1_i32 = arith.constant 1 : i32
    %0 = arith.addi %arg2, %c1_i32 : i32
    %c1_i32_0 = arith.constant 1 : i32
    %1 = arith.muli %0, %c1_i32_0 : i32
    %c0_i32 = arith.constant 0 : i32
    %c0_i32_1 = arith.constant 0 : i32
    return %arg0, %c0_i32, %1 : i32, i32, i32
  }
  func.func @transform_2(%arg0: i32, %arg1: i32, %arg2: i32) -> (i32, i32) {
    %c0_i32 = arith.constant 0 : i32
    %c0_i32_0 = arith.constant 0 : i32
    return %arg1, %c0_i32 : i32, i32
  }
  func.func @transform_3(%arg0: i32, %arg1: i32, %arg2: i32) -> (i32, i32) {
    %c0_i32 = arith.constant 0 : i32
    %c0_i32_0 = arith.constant 0 : i32
    return %c0_i32, %arg2 : i32, i32
  }
  func.func @transform_4(%arg0: i32, %arg1: i32, %arg2: i32) -> (i32, i32, i32) {
    %c0_i32 = arith.constant 0 : i32
    %c0_i32_0 = arith.constant 0 : i32
    return %arg0, %arg1, %c0_i32 : i32, i32, i32
  }
}

</mosaic_0001>

<llo_original>
// kernel: tpu_custom_call.1
$region0: #{tpu_custom_call.1}
  #allocation0 [shape = 'u32[]', space=smem, size = 0x4, offset = 0x4, fixed_abs, tag = 'smem constant byte address 0x4 - core index']
  #allocation1 [shape = 'u32[144,128]{1,0:T(1,128)}', space=vmem, size = 0x12000, scoped, tag = 'internal scratch']
  #allocation2 [shape = 'f32[5,256]{1,0:T(8,128)}', space=vmem, size = 0x2000, scoped, tag = 'scratch operand']
  #allocation3 [shape = 'f32[21,128]{1,0:T(8,128)}', space=vmem, size = 0x3000, scoped, tag = 'scratch operand']
  #allocation4 [shape = 'f32[1,8,128]{2,1,0:T(8,128)}', space=vmem, size = 0x1000, scoped, tag = 'scratch operand']
  %s0 = inlined_call_operand.hbm [shape: f32[2,4,256], index: 0, kind: input, shape index: {}]
  %s1 = inlined_call_operand.hbm [shape: f32[2,4,256], index: 1, kind: input, shape index: {}]
  %s2 = inlined_call_operand.hbm [shape: f32[8,21], index: 2, kind: input, shape index: {}]
  %s3 = inlined_call_operand.vmem [shape: f32[1,128], index: 3, kind: input, shape index: {}]
  %s4 = inlined_call_operand.vmem [shape: f32[2,8,1], index: 4, kind: output, shape index: {}]
  %s5 = sld [smem:[#allocation0]]
  $region69: #{tpu_custom_call.1} parent=0
    _
  %s7 = ssub.s32 1, %s5
  %s8 = scalar_select 0, %s7, %s5
  $region1: #{tpu_custom_call.1} parent=0
    #allocation5 [shape = 'u8[4096]{0}', space=vmem, size = 0x1000, scoped, tag = 'input window, operand 0']
    #allocation6 [shape = 's32[2]{0}', space=sflag, size = 0x8, scoped, tag = 'scoped memory for tpu_custom_call.1']
    #allocation7 [shape = 'u8[4096]{0}', space=vmem, size = 0x1000, scoped, tag = 'input window, operand 1']
    #allocation8 [shape = 's32[2]{0}', space=sflag, size = 0x8, scoped, tag = 'scoped memory for tpu_custom_call.1']
    #allocation9 [shape = 'u8[4096]{0}', space=vmem, size = 0x1000, scoped, tag = 'input window, operand 2, single buffered']
    %9 = vsyncpa [#allocation6], 0
    %s10 = scalar_lea.sflag [#allocation6], 1
    %11 = vsyncpa %s10, 0
    %12 = vsyncpa [#allocation8], 0
    %s13 = scalar_lea.sflag [#allocation8], 1
    %14 = vsyncpa %s13, 0
    loop: start=0, step=1, limit=4
    $region2: #{tpu_custom_call.1} parent=1 // loop_pre_header
      _
    $region3: #{tpu_custom_call.1} parent=1 // loop_header
      %s16 = sphi 0, %s20
      %p17 = scmp.ge.s32.totalorder %s16, 4
      %s23 = sphi 0, %s42
      %s24 = sphi 0, %s38
      %s25 = sphi 0, %s34
      %s26 = sphi 0, %s23
      %s27 = sphi 0, %s24
      %s28 = sphi 0, %s25
      %s29 = sphi 0, %s26
      %s30 = sphi 0, %s27
      %s31 = sphi 0, %s28
      %s47 = sphi 0, %s49
      %s50 = sphi 0, %s47
      %s51 = sphi 0, %s50
      %s67 = sphi 0, %s51
      %s77 = sphi 0, %s79
      %s80 = sphi 0, %s77
      %s81 = sphi 0, %s80
      %s97 = sphi 0, %s81
      %s103 = sphi 0, %s105
      %s106 = sphi 0, %s103
      %s107 = sphi 0, %s106
      %s123 = sphi 0, %s107
      %s129 = sphi 0, %s131
      %s132 = sphi 0, %s129
      %s133 = sphi 0, %s132
      %s149 = sphi 0, %s133
      %s157 = sphi 0, %s159
      %s160 = sphi 0, %s157
      %s161 = sphi 0, %s160
      %s177 = sphi 0, %s161
    $region4: #{tpu_custom_call.1} parent=1 // loop_header_branch
      %19 = sbr.rel (%p17) target = $region8
    $region5: #{tpu_custom_call.1} parent=1 // loop_body
      %s21 = ssub.s32 %s16, 1
      %s22 = ssub.s32 %s16, 2
      %s32 = sadd.s32 1, %s25
      %p33 = scmp.ge.s32.totalorder %s32, 1
      %s34 = scalar_select %p33, 0, %s32
      %s35 = sadd.s32 1, %s24
      %s36 = scalar_select %p33, %s35, %s24
      %p37 = scmp.ge.s32.totalorder %s36, 1
      %s38 = scalar_select %p37, 0, %s36
      %s39 = sadd.s32 1, %s23
      %s40 = scalar_select %p37, %s39, %s23
      %p41 = scmp.ge.s32.totalorder %s40, 2
      %s42 = scalar_select %p41, 0, %s40
      %s43 = ssub.s32 %s23, %s42
      %s44 = ssub.s32 %s25, %s34
      %s45 = sor.u32 %s43, %s44
      %p46 = scmp.eq.s32.totalorder %s45, 0
      %s48 = sadd.s32 %s47, 1
      %s49 = scalar_select %p46, %s47, %s48
      %p52 = pneg %p46
      %p53 = scmp.eq.s32.totalorder %s16, 1
      %p54 = por %p52, %p53
      %p55 = scmp.ne.s32.totalorder %s47, %s50
      %p56 = scmp.eq.s32.totalorder %s16, 0
      %p57 = por %p55, %p56
      %p58 = scmp.ne.s32.totalorder %s47, %s50
      %p59 = scmp.eq.s32.totalorder %s21, 1
      %p60 = por %p58, %p59
      %p61 = scmp.ne.s32.totalorder %s50, %s51
      %p62 = scmp.eq.s32.totalorder %s21, 0
      %p63 = por %p61, %p62
      %p64 = scmp.ne.s32.totalorder %s50, %s51
      %p65 = scmp.eq.s32.totalorder %s22, 1
      %p66 = por %p64, %p65
      %p68 = scmp.ne.s32.totalorder %s51, %s67
      %p69 = scmp.eq.s32.totalorder %s22, 0
      %p70 = por %p68, %p69
      %s71 = sadd.s32 %s25, 1
      %s72 = sadd.s32 %s34, 1
      %s73 = ssub.s32 %s23, %s42
      %s74 = ssub.s32 %s71, %s72
      %s75 = sor.u32 %s73, %s74
      %p76 = scmp.eq.s32.totalorder %s75, 0
      %s78 = sadd.s32 %s77, 1
      %s79 = scalar_select %p76, %s77, %s78
      %p82 = pneg %p76
      %p83 = scmp.eq.s32.totalorder %s16, 1
      %p84 = por %p82, %p83
      %p85 = scmp.ne.s32.totalorder %s77, %s80
      %p86 = scmp.eq.s32.totalorder %s16, 0
      %p87 = por %p85, %p86
      %p88 = scmp.ne.s32.totalorder %s77, %s80
      %p89 = scmp.eq.s32.totalorder %s21, 1
      %p90 = por %p88, %p89
      %p91 = scmp.ne.s32.totalorder %s80, %s81
      %p92 = scmp.eq.s32.totalorder %s21, 0
      %p93 = por %p91, %p92
      %p94 = scmp.ne.s32.totalorder %s80, %s81
      %p95 = scmp.eq.s32.totalorder %s22, 1
      %p96 = por %p94, %p95
      %p98 = scmp.ne.s32.totalorder %s81, %s97
      %p99 = scmp.eq.s32.totalorder %s22, 0
      %p100 = por %p98, %p99
      %s101 = ssub.s32 %s24, %s38
      %p102 = scmp.eq.s32.totalorder %s101, 0
      %s104 = sadd.s32 %s103, 1
      %s105 = scalar_select %p102, %s103, %s104
      %p108 = pneg %p102
      %p109 = scmp.eq.s32.totalorder %s16, 1
      %p110 = por %p108, %p109
      %p111 = scmp.ne.s32.totalorder %s103, %s106
      %p112 = scmp.eq.s32.totalorder %s16, 0
      %p113 = por %p111, %p112
      %p114 = scmp.ne.s32.totalorder %s103, %s106
      %p115 = scmp.eq.s32.totalorder %s21, 1
      %p116 = por %p114, %p115
      %p117 = scmp.ne.s32.totalorder %s106, %s107
      %p118 = scmp.eq.s32.totalorder %s21, 0
      %p119 = por %p117, %p118
      %p120 = scmp.ne.s32.totalorder %s106, %s107
      %p121 = scmp.eq.s32.totalorder %s22, 1
      %p122 = por %p120, %p121
      %p124 = scmp.ne.s32.totalorder %s107, %s123
      %p125 = scmp.eq.s32.totalorder %s22, 0
      %p126 = por %p124, %p125
      %s127 = ssub.s32 %s25, %s34
      %p128 = scmp.eq.s32.totalorder %s127, 0
      %s130 = sadd.s32 %s129, 1
      %s131 = scalar_select %p128, %s129, %s130
      %p134 = pneg %p128
      %p135 = scmp.eq.s32.totalorder %s16, 1
      %p136 = por %p134, %p135
      %p137 = scmp.ne.s32.totalorder %s129, %s132
      %p138 = scmp.eq.s32.totalorder %s16, 0
      %p139 = por %p137, %p138
      %p140 = scmp.ne.s32.totalorder %s129, %s132
      %p141 = scmp.eq.s32.totalorder %s21, 1
      %p142 = por %p140, %p141
      %p143 = scmp.ne.s32.totalorder %s132, %s133
      %p144 = scmp.eq.s32.totalorder %s21, 0
      %p145 = por %p143, %p144
      %p146 = scmp.ne.s32.totalorder %s132, %s133
      %p147 = scmp.eq.s32.totalorder %s22, 1
      %p148 = por %p146, %p147
      %p150 = scmp.ne.s32.totalorder %s133, %s149
      %p151 = scmp.eq.s32.totalorder %s22, 0
      %p152 = por %p150, %p151
      %s153 = ssub.s32 %s23, %s42
      %s154 = ssub.s32 %s24, %s38
      %s155 = sor.u32 %s153, %s154
      %p156 = scmp.eq.s32.totalorder %s155, 0
      %s158 = sadd.s32 %s157, 1
      %s159 = scalar_select %p156, %s157, %s158
      %p162 = pneg %p156
      %p163 = scmp.eq.s32.totalorder %s16, 1
      %p164 = por %p162, %p163
      %p165 = scmp.ne.s32.totalorder %s157, %s160
      %p166 = scmp.eq.s32.totalorder %s16, 0
      %p167 = por %p165, %p166
      %p168 = scmp.ne.s32.totalorder %s157, %s160
      %p169 = scmp.eq.s32.totalorder %s21, 1
      %p170 = por %p168, %p169
      %p171 = scmp.ne.s32.totalorder %s160, %s161
      %p172 = scmp.eq.s32.totalorder %s21, 0
      %p173 = por %p171, %p172
      %p174 = scmp.ne.s32.totalorder %s160, %s161
      %p175 = scmp.eq.s32.totalorder %s22, 1
      %p176 = por %p174, %p175
      %p178 = scmp.ne.s32.totalorder %s161, %s177
      %p179 = scmp.eq.s32.totalorder %s22, 0
      %p180 = por %p178, %p179
      %p181 = scmp.le.s32.totalorder 1, %s16
      %p182 = scmp.lt.s32.totalorder %s16, 3
      %p183 = pnand %p181, %p182
      %p184 = pneg %p183
      // Predicated region
      $region9: #{tpu_custom_call.1} parent=5 // pred_check
        _
      $region10: #{tpu_custom_call.1} parent=5 // pred_check_branch
        %186 = sbr.rel (%p183) target = $region12
      $region11: #{tpu_custom_call.1} parent=5 // pred_region
        %s187 = ssub.s32 %s16, 1
        // Predicated region
        $region13: #{tpu_custom_call.1} parent=11 // pred_check
          %p188 = pneg %p119
        $region14: #{tpu_custom_call.1} parent=11 // pred_check_branch
          %190 = sbr.rel (%p188) target = $region16
        $region15: #{tpu_custom_call.1} parent=11 // pred_region
          %s192 = ssub.s32 128, 128
          %193 = vsyncadd [#allocation8], %s192
          %s194 = smul.addr %s27, 128
          %s195 = scalar_lea.hbm %s2, %s194
          %s197 = sshll.u32 [#allocation9], 4
          %s198 = int_to_ptr.vmem [resolvable:$true] %s197
          %200 = dma.hbm_to_vmem [thread:$0]  %s195, 128, %s198, [#allocation8]
        $region16: #{tpu_custom_call.1} parent=11 // pred_fallthru
          _
        // Predicated region
        $region17: #{tpu_custom_call.1} parent=11 // pred_check
          %p201 = pneg %p145
        $region18: #{tpu_custom_call.1} parent=11 // pred_check_branch
          %203 = sbr.rel (%p201) target = $region20
        $region19: #{tpu_custom_call.1} parent=11 // pred_region
          %p204 = scmp.lt.s32.totalorder %s28, 0
          %s205 = scalar_select %p204, %s28, 0
          %s206 = scalar_lea.vmem %s3, %s205
        $region20: #{tpu_custom_call.1} parent=11 // pred_fallthru
          _
      $region12: #{tpu_custom_call.1} parent=5 // pred_fallthru
        _
      %p207 = scmp.lt.s32.totalorder %s16, 2
      // Predicated region
      $region21: #{tpu_custom_call.1} parent=5 // pred_check
        %p208 = pneg %p207
      $region22: #{tpu_custom_call.1} parent=5 // pred_check_branch
        %210 = sbr.rel (%p208) target = $region24
      $region23: #{tpu_custom_call.1} parent=5 // pred_region
        // Predicated region
        $region25: #{tpu_custom_call.1} parent=23 // pred_check
          %p211 = pneg %p57
        $region26: #{tpu_custom_call.1} parent=23 // pred_check_branch
          %213 = sbr.rel (%p211) target = $region28
        $region27: #{tpu_custom_call.1} parent=23 // pred_region
          %s214 = sand.u32 %s47, 1
          %s215 = scalar_lea.sflag [#allocation6], %s214
          %s216 = sand.u32 %s47, 1
          %s217 = smul.addr %s216, 4
          %s218 = scalar_lea.vmem [#allocation5], %s217
          %s220 = ssub.s32 64, 64
          %221 = vsyncadd %s215, %s220
          %s222 = smul.addr %s23, 2
          %s223 = sadd.s32 %s25, %s222
          %s224 = smul.addr %s223, 64
          %s225 = scalar_lea.hbm %s0, %s224
          %s227 = sshll.u32 %s218, 4
          %s228 = int_to_ptr.vmem [resolvable:$true] %s227
          %230 = dma.hbm_to_vmem [thread:$0]  %s225, 64, %s228, %s215
        $region28: #{tpu_custom_call.1} parent=23 // pred_fallthru
          _
        // Predicated region
        $region29: #{tpu_custom_call.1} parent=23 // pred_check
          %p231 = pneg %p87
        $region30: #{tpu_custom_call.1} parent=23 // pred_check_branch
          %233 = sbr.rel (%p231) target = $region32
        $region31: #{tpu_custom_call.1} parent=23 // pred_region
          %s234 = sand.u32 %s16, 1
          %s235 = scalar_lea.sflag [#allocation8], %s234
          %s236 = sand.u32 %s77, 1
          %s237 = smul.addr %s236, 4
          %s238 = scalar_lea.vmem [#allocation7], %s237
          %s239 = sadd.s32 %s25, 1
          %s241 = ssub.s32 64, 64
          %242 = vsyncadd %s235, %s241
          %s243 = smul.addr %s23, 2
          %s244 = sadd.s32 %s239, %s243
          %s245 = smul.addr %s244, 64
          %s246 = scalar_lea.hbm %s1, %s245
          %s248 = sshll.u32 %s238, 4
          %s249 = int_to_ptr.vmem [resolvable:$true] %s248
          %251 = dma.hbm_to_vmem [thread:$0]  %s246, 64, %s249, %s235
        $region32: #{tpu_custom_call.1} parent=23 // pred_fallthru
          _
      $region24: #{tpu_custom_call.1} parent=5 // pred_fallthru
        _
      %p252 = scmp.le.s32.totalorder 1, %s16
      %p253 = scmp.lt.s32.totalorder %s16, 3
      %p254 = pnand %p252, %p253
      %p255 = pneg %p254
      // Predicated region
      $region33: #{tpu_custom_call.1} parent=5 // pred_check
        _
      $region34: #{tpu_custom_call.1} parent=5 // pred_check_branch
        %257 = sbr.rel (%p254) target = $region36
      $region35: #{tpu_custom_call.1} parent=5 // pred_region
        %s258 = ssub.s32 %s16, 1
        %s259 = sand.u32 %s50, 1
        %s260 = scalar_lea.sflag [#allocation6], %s259
        %s261 = sand.u32 %s50, 1
        %s262 = smul.addr %s261, 4
        %s263 = scalar_lea.vmem [#allocation5], %s262
        // Predicated region
        $region37: #{tpu_custom_call.1} parent=35 // pred_check
          %p264 = pneg %p63
        $region38: #{tpu_custom_call.1} parent=35 // pred_check_branch
          %266 = sbr.rel (%p264) target = $region40
        $region39: #{tpu_custom_call.1} parent=35 // pred_region
          %267 = dma.done %s260, 64
        $region40: #{tpu_custom_call.1} parent=35 // pred_fallthru
          _
        %s268 = sand.u32 %s21, 1
        %s269 = scalar_lea.sflag [#allocation8], %s268
        %s270 = sand.u32 %s80, 1
        %s271 = smul.addr %s270, 4
        %s272 = scalar_lea.vmem [#allocation7], %s271
        // Predicated region
        $region41: #{tpu_custom_call.1} parent=35 // pred_check
          %p273 = pneg %p93
        $region42: #{tpu_custom_call.1} parent=35 // pred_check_branch
          %275 = sbr.rel (%p273) target = $region44
        $region43: #{tpu_custom_call.1} parent=35 // pred_region
          %276 = dma.done %s269, 64
        $region44: #{tpu_custom_call.1} parent=35 // pred_fallthru
          _
        // Predicated region
        $region45: #{tpu_custom_call.1} parent=35 // pred_check
          %p277 = pneg %p119
        $region46: #{tpu_custom_call.1} parent=35 // pred_check_branch
          %279 = sbr.rel (%p277) target = $region48
        $region47: #{tpu_custom_call.1} parent=35 // pred_region
          %280 = dma.done [#allocation8], 128
        $region48: #{tpu_custom_call.1} parent=35 // pred_fallthru
          _
        %s281 = sand.u32 %s50, 1
        %s282 = scalar_lea.sflag [#allocation6], %s281
        %s283 = sand.u32 %s50, 1
        %s284 = smul.addr %s283, 4
        %s285 = scalar_lea.vmem [#allocation5], %s284
        %p286 = pneg %p63
        %p287 = pneg %p60
        %s288 = sand.u32 %s21, 1
        %s289 = scalar_lea.sflag [#allocation8], %s288
        %s290 = sand.u32 %s80, 1
        %s291 = smul.addr %s290, 4
        %s292 = scalar_lea.vmem [#allocation7], %s291
        %p293 = pneg %p93
        %p294 = pneg %p90
        %p295 = pneg %p119
        %p296 = pneg %p116
        %p297 = scmp.lt.s32.totalorder %s28, 0
        %s298 = scalar_select %p297, %s28, 0
        %s299 = scalar_lea.vmem %s3, %s298
        %p300 = pneg %p145
        %p301 = pneg %p142
        %p302 = pneg %p173
        %p303 = pneg %p170
        %p304 = scmp.lt.s32.totalorder %s26, 1
        %s305 = scalar_select %p304, %s26, 1
        %p306 = scmp.lt.s32.totalorder %s27, 0
        %s307 = scalar_select %p306, %s27, 0
        %s308 = sadd.s32 %s307, %s305
        %s309 = smul.addr %s308, 8
        %s310 = scalar_lea.vmem %s4, %s309
        %s311 = sadd.s32 %s28, 1
        %p312 = scmp.lt.s32.totalorder %s28, 0
        %s313 = scalar_select %p312, %s28, 0
        %s314 = scalar_lea.vmem %s3, %s313
        %p315 = scmp.lt.s32.totalorder %s26, 1
        %s316 = scalar_select %p315, %s26, 1
        %p317 = scmp.lt.s32.totalorder %s27, 0
        %s318 = scalar_select %p317, %s27, 0
        %s319 = sadd.s32 %s318, %s316
        %s320 = smul.addr %s319, 8
        %s321 = scalar_lea.vmem %s4, %s320
        %p322 = scmp.eq.s32.totalorder %s28, 0
        // Predicated region
        $region49: #{tpu_custom_call.1} parent=35 // pred_check
          %p323 = pneg %p322
        $region50: #{tpu_custom_call.1} parent=35 // pred_check_branch
          %325 = sbr.rel (%p323) target = $region52
        $region51: #{tpu_custom_call.1} parent=35 // pred_region
          %326 = vst [vmem:[#allocation4] sm:$0xff] inf
        $region52: #{tpu_custom_call.1} parent=35 // pred_fallthru
          _
        %327 = vst [vmem:[#allocation3 + $0x14] sm:$0x1] 1.0
        %v328 = vld [vmem:[#allocation9] sm:$0xff]
        %v329 = vld [vmem:[%s314] sm:$0x1]
        %v330 = vld [vmem:[%s263] sm:$0xf]
        %v331 = vld [vmem:[%s272] sm:$0xf]
        %332 = vst [vmem:[#allocation2] sm:$0xf] %v330
        %333 = vst [vmem:[#allocation2 + $0x8] sm:$0xf] %v331
        %v334 = vmul.f32 %v330, %v330
        %vm335 = vcmask 1043456
        %v336 = vsel %vm335, %v334, 0.0
        %v337 = vrot.slane %v336, 4
        %v338 = vadd.f32 %v336, %v337
        %v339 = vrot.slane %v338, 2
        %v340 = vadd.f32 %v338, %v339
        %v341 = vrot.slane %v340, 1
        %v342 = vadd.f32 %v340, %v341
        %343 = vst [vmem:[#allocation2 + $0x4] sm:$0x1] %v342
        %v344 = vmul.f32 %v331, %v331
        %v345 = vsel %vm335, %v344, 0.0
        %v346 = vrot.slane %v345, 4
        %v347 = vadd.f32 %v345, %v346
        %v348 = vrot.slane %v347, 2
        %v349 = vadd.f32 %v347, %v348
        %v350 = vrot.slane %v349, 1
        %v351 = vadd.f32 %v349, %v350
        %352 = vst [vmem:[#allocation2 + $0xc] sm:$0x1] %v351
        %353 = vst [vmem:[#allocation3] sm:$0xf] %v330
        %v354 = vld [vmem:[#allocation2] sm:$0xf]
        %v355 = vld [vmem:[#allocation2 + $0x8] sm:$0xf]
        %358 = vrot.lane.b32.xlu0 %v354, 127
        %v359 = vpop.permute.xlu0 %358
        %360 = vrot.lane.b32.xlu0 %v355, 127
        %v361 = vpop.permute.xlu0 %360
        %vm362 = vcmask 1039360
        %v363 = vsel %vm362, %v359, %v361
        %365 = vst [vmem:[#allocation3 + $0x4] sm:$0xf] %v363
        %v366 = vld [vmem:[#allocation2] sm:$0xf]
        %v367 = vld [vmem:[#allocation2 + $0x8] sm:$0xf]
        %370 = vrot.lane.b32.xlu0 %v366, 126
        %v371 = vpop.permute.xlu0 %370
        %372 = vrot.lane.b32.xlu0 %v367, 126
        %v373 = vpop.permute.xlu0 %372
        %vm374 = vcmask 1031168
        %v375 = vsel %vm374, %v371, %v373
        %377 = vst [vmem:[#allocation3 + $0x8] sm:$0xf] %v375
        %v378 = vld [vmem:[#allocation2] sm:$0xf]
        %v379 = vld [vmem:[#allocation2 + $0x8] sm:$0xf]
        %382 = vrot.lane.b32.xlu0 %v378, 125
        %v383 = vpop.permute.xlu0 %382
        %384 = vrot.lane.b32.xlu0 %v379, 125
        %v385 = vpop.permute.xlu0 %384
        %vm386 = vcmask 1022976
        %v387 = vsel %vm386, %v383, %v385
        %389 = vst [vmem:[#allocation3 + $0xc] sm:$0xf] %v387
        %v390 = vld [vmem:[#allocation2] sm:$0xf]
        %v391 = vld [vmem:[#allocation2 + $0x8] sm:$0xf]
        %394 = vrot.lane.b32.xlu0 %v390, 124
        %v395 = vpop.permute.xlu0 %394
        %396 = vrot.lane.b32.xlu0 %v391, 124
        %v397 = vpop.permute.xlu0 %396
        %vm398 = vcmask 1014784
        %v399 = vsel %vm398, %v395, %v397
        %401 = vst [vmem:[#allocation3 + $0x10] sm:$0xf] %v399
        %v402 = vld [vmem:[#allocation3] sm:$0xff]
        %v403 = vld [vmem:[#allocation3 + $0x8] sm:$0xff]
        %v404 = vld [vmem:[#allocation3 + $0x10] sm:$0x1f]
        %v405 = vld [vmem:[#allocation2 + $0x4] ss:$0 sm:$0xff]
        %v406 = vadd.f32 %v405, %v329
        %v407 = vld [vmem:[#allocation2 + $0xc] ss:$0 sm:$0xff]
        %410 = vrot.lane.b32.xlu0 %v405, 127
        %v411 = vpop.permute.xlu0 %410
        %412 = vrot.lane.b32.xlu0 %v407, 127
        %v413 = vpop.permute.xlu0 %412
        %v414 = vsel %vm362, %v411, %v413
        %v416 = vadd.f32 %v406, %v414
        %417 = vrot.lane.b32.xlu0 %v405, 126
        %v418 = vpop.permute.xlu0 %417
        %419 = vrot.lane.b32.xlu0 %v407, 126
        %v420 = vpop.permute.xlu0 %419
        %v421 = vsel %vm374, %v418, %v420
        %v423 = vadd.f32 %v416, %v421
        %424 = vrot.lane.b32.xlu0 %v405, 125
        %v425 = vpop.permute.xlu0 %424
        %426 = vrot.lane.b32.xlu0 %v407, 125
        %v427 = vpop.permute.xlu0 %426
        %v428 = vsel %vm386, %v425, %v427
        %v430 = vadd.f32 %v423, %v428
        %431 = vrot.lane.b32.xlu0 %v405, 124
        %v432 = vpop.permute.xlu0 %431
        %433 = vrot.lane.b32.xlu0 %v407, 124
        %v434 = vpop.permute.xlu0 %433
        %v435 = vsel %vm398, %v432, %v434
        %v437 = vadd.f32 %v430, %v435
        %v438 = vlaneseq
        %v439 = vshrl.u32 %v438, 7
        %v440 = vsub.s32 0, %v439
        %v441 = vrot.slane %v437, %v440
        %vm442 = vcmask 171008
        %v444 = vsel %vm442, %v328, 0
        %vm446 = vcmask 1044480
        %v448 = vsel %vm446, %v404, 0
        %450 = vmatprep.subr.mxu0 0.0
        %451 = vmatpush1.msra.mxu0 %v402
        %452 = vmatprep.subr.mxu0 0.0
        %453 = vmatpush1.msra.mxu0 %v403
        %454 = vmatprep.subr.mxu0 0.0
        %455 = vmatpush1.msra.mxu0 %v448
        %456 = vmatprep.subr.mxu0 0.0
        %457 = vmatpush1.msra.mxu0 0.0
        %458 = vmatprep.subr.mxu0 0.0
        %459 = vmatpush1.msra.mxu0 0.0
        %460 = vmatprep.subr.mxu0 0.0
        %461 = vmatpush1.msra.mxu0 0.0
        %462 = vmatprep.subr.mxu0 0.0
        %463 = vmatpush1.msra.mxu0 0.0
        %464 = vmatprep.subr.mxu0 0.0
        %465 = vmatpush1.msra.mxu0 0.0
        %466 = vmatprep.subr.mxu0 0.0
        %467 = vmatpush1.msra.mxu0 0.0
        %468 = vmatprep.subr.mxu0 0.0
        %469 = vmatpush1.msra.mxu0 0.0
        %470 = vmatprep.subr.mxu0 0.0
        %471 = vmatpush1.msra.mxu0 0.0
        %472 = vmatprep.subr.mxu0 0.0
        %473 = vmatpush1.msra.mxu0 0.0
        %474 = vmatprep.subr.mxu0 0.0
        %475 = vmatpush1.msra.mxu0 0.0
        %476 = vmatprep.subr.mxu0 0.0
        %477 = vmatpush1.msra.mxu0 0.0
        %478 = vmatprep.subr.mxu0 0.0
        %479 = vmatpush1.msra.mxu0 0.0
        %480 = vmatprep.subr.mxu0 0.0
        %481 = vmatpush1.msra.mxu0 0.0
        %482 = vmatprep.subr.mxu0 0.0
        %483 = vmatpush1.msra.mxu0 0.0
        %484 = vmatprep.subr.mxu0 0.0
        %485 = vmatpush1.msra.mxu0 0.0
        %486 = vmatprep.subr.mxu0 0.0
        %487 = vmatpush1.msra.mxu0 0.0
        %488 = vmatprep.subr.mxu0 0.0
        %489 = vmatpush1.msra.mxu0 0.0
        %490 = vmatprep.subr.mxu0 0.0
        %491 = vmatpush1.msra.mxu0 0.0
        %492 = vmatprep.subr.mxu0 0.0
        %493 = vmatpush1.msra.mxu0 0.0
        %494 = vmatprep.subr.mxu0 0.0
        %495 = vmatpush1.msra.mxu0 0.0
        %496 = vmatprep.subr.mxu0 0.0
        %497 = vmatpush1.msra.mxu0 0.0
        %498 = vmatprep.subr.mxu0 0.0
        %499 = vmatpush1.msra.mxu0 0.0
        %500 = vmatprep.subr.mxu0 0.0
        %501 = vmatpush1.msra.mxu0 0.0
        %502 = vmatprep.subr.mxu0 0.0
        %503 = vmatpush1.msra.mxu0 0.0
        %504 = vmatprep.subr.mxu0 0.0
        %505 = vmatpush1.msra.mxu0 0.0
        %506 = vmatprep.subr.mxu0 0.0
        %507 = vmatpush1.msra.mxu0 0.0
        %508 = vmatprep.subr.mxu0 0.0
        %509 = vmatpush1.msra.mxu0 0.0
        %510 = vmatprep.subr.mxu0 0.0
        %511 = vmatpush1.msra.mxu0 0.0
        %512 = vmatprep.subr.mxu0 0.0
        %513 = vmatpush1.msra.mxu0 0.0
        %514 = vmatprep.mubr.f32.mxu0 0.0
        %515 = vmatmul.mubr.f32.gmra.mrb[0].mxu0 %v444
        %v516 = vpop.f32.mrb[0].mxu0
        %v517 = vadd.f32 %v441, %v516
        %v518 = vpop.f32.mrb[0].mxu0
        %519 = vdwg.mxu0
        %v520 = vld [vmem:[#allocation4] sm:$0xff]
        %v521 = vmin.f32 %v520, %v517
        %522 = vst [vmem:[#allocation4] sm:$0xff] %v521
        // Predicated region
        $region53: #{tpu_custom_call.1} parent=35 // pred_check
          %p523 = pneg %p322
        $region54: #{tpu_custom_call.1} parent=35 // pred_check_branch
          %525 = sbr.rel (%p523) target = $region56
        $region55: #{tpu_custom_call.1} parent=35 // pred_region
          %v526 = vld [vmem:[#allocation4] sm:$0xff]
          %527 = vmin.xlane.f32.xlu0 %v526
          %v528 = vpop.xlane.xlu0 %527
          %vm529 = vcmask 7168
          %530 = vst.msk [vmem:[%s321] sm:$0xff] %vm529, %v528
        $region56: #{tpu_custom_call.1} parent=35 // pred_fallthru
          _
        %p531 = scmp.lt.s32.totalorder %s26, 1
        %s532 = scalar_select %p531, %s26, 1
        %p533 = scmp.lt.s32.totalorder %s27, 0
        %s534 = scalar_select %p533, %s27, 0
        %s535 = sadd.s32 %s534, %s532
        %s536 = smul.addr %s535, 8
        %s537 = scalar_lea.vmem %s4, %s536
        // Predicated region
        $region57: #{tpu_custom_call.1} parent=35 // pred_check
          %p538 = pneg %p170
        $region58: #{tpu_custom_call.1} parent=35 // pred_check_branch
          %540 = sbr.rel (%p538) target = $region60
        $region59: #{tpu_custom_call.1} parent=35 // pred_region
          _
        $region60: #{tpu_custom_call.1} parent=35 // pred_fallthru
          _
      $region36: #{tpu_custom_call.1} parent=5 // pred_fallthru
        _
      %p541 = scmp.le.s32.totalorder 2, %s16
      // Predicated region
      $region61: #{tpu_custom_call.1} parent=5 // pred_check
        %p542 = pneg %p541
      $region62: #{tpu_custom_call.1} parent=5 // pred_check_branch
        %544 = sbr.rel (%p542) target = $region64
      $region63: #{tpu_custom_call.1} parent=5 // pred_region
        %s545 = ssub.s32 %s16, 2
        // Predicated region
        $region65: #{tpu_custom_call.1} parent=63 // pred_check
          %p546 = pneg %p176
        $region66: #{tpu_custom_call.1} parent=63 // pred_check_branch
          %548 = sbr.rel (%p546) target = $region68
        $region67: #{tpu_custom_call.1} parent=63 // pred_region
          %p549 = scmp.lt.s32.totalorder %s29, 1
          %s550 = scalar_select %p549, %s29, 1
          %p551 = scmp.lt.s32.totalorder %s30, 0
          %s552 = scalar_select %p551, %s30, 0
          %s553 = sadd.s32 %s552, %s550
          %s554 = smul.addr %s553, 8
          %s555 = scalar_lea.vmem %s4, %s554
        $region68: #{tpu_custom_call.1} parent=63 // pred_fallthru
          _
      $region64: #{tpu_custom_call.1} parent=5 // pred_fallthru
        _
    $region6: #{tpu_custom_call.1} parent=1 // loop_footer
      %s20 = sadd.s32 1, %s16
    $region7: #{tpu_custom_call.1} parent=1 // loop_footer_branch
      %15 = sbr.rel target = $region3
    $region8: #{tpu_custom_call.1} parent=1 // loop_exit
      _
    %556 = vsyncpa [#allocation6], 1
    %s557 = scalar_lea.sflag [#allocation6], 1
    %558 = vsyncpa %s557, 1
    %559 = vsyncpa [#allocation8], 1
    %s560 = scalar_lea.sflag [#allocation8], 1
    %561 = vsyncpa %s560, 1

</llo_original>
